<compile_context>
chip_gen: v7x
topology: tpu7x:2x2x1
jax: 0.10.0
libtpu: 0.0.40
codegen_flags: <defaults>
</compile_context>

<pallas_src>
import jax
import jax.numpy as jnp
from jax import lax
from jax.experimental import pallas as pl
from jax.experimental.pallas import tpu as pltpu

LANES = 128
SUB_ROWS = 256             # inner compute chunk: (256,128) f32 = 128 KiB / input
TARGET_BLOCK_ROWS = 4096   # per-grid-step block: (4096,128) f32 = 2 MiB / input


def _round_up(x, m):
    return -(-x // m) * m


def _choose_tiling(rows):
    """Static tiling decision: (num_tiles, block_rows, sub_rows)."""
    if rows <= SUB_ROWS:
        # Tiny input: one tile, one chunk.
        block_rows = _round_up(rows, 8)
        return 1, block_rows, block_rows
    if rows <= TARGET_BLOCK_ROWS:
        # Single tile, chunked inner loop.
        return 1, _round_up(rows, SUB_ROWS), SUB_ROWS
    # Large input: even tile count (>=2) so the "parallel" grid axis shards
    # across both TensorCores on v7x; ~TARGET_BLOCK_ROWS rows per tile.
    num_tiles = max(2, 2 * pl.cdiv(rows, 2 * TARGET_BLOCK_ROWS))
    block_rows = _round_up(pl.cdiv(rows, num_tiles), SUB_ROWS)
    num_tiles = pl.cdiv(rows, block_rows)   # drop any fully out-of-range tile
    return num_tiles, block_rows, SUB_ROWS


def _make_kernel(block_rows, sub_rows, num_tiles, valid_rows):
    num_chunks = block_rows // sub_rows
    # Masking is only compiled in when the grid over-covers the valid rows
    # (the over-covered region of the last block is never DMA'd; its VMEM
    # content is unspecified, so it must be masked, not padded).
    need_mask = (num_tiles * block_rows) != valid_rows

    def kernel(m1_ref, m2_ref, out_ref):
        tile = pl.program_id(0)
        if need_mask:
            # Hoisted out of the chunk loop (broadcasts are not CSE'd).
            row_ids = lax.broadcasted_iota(jnp.int32, (sub_rows, LANES), 0)

        def chunk_sum(start, acc):
            m1 = m1_ref[pl.ds(start, sub_rows), :].astype(jnp.float32)
            m2 = m2_ref[pl.ds(start, sub_rows), :].astype(jnp.float32)
            # Binary target comes from the *other* mask; select-before-log
            # halves the EUP log() pushes vs. computing log(p) and log(1-p).
            q1 = jnp.where(m2 > 0.5, m1, 1.0 - m1)   # BCE(mask1, mask2 > 0.5)
            q2 = jnp.where(m1 > 0.5, m2, 1.0 - m2)   # BCE(mask2, mask1 > 0.5)
            e = -(jnp.maximum(jnp.log(q1), -100.0)
                  + jnp.maximum(jnp.log(q2), -100.0))
            if need_mask:
                limit = valid_rows - (tile * block_rows + start)
                e = jnp.where(row_ids < limit, e, 0.0)
            # Fold the chunk's rows (a multiple of 8) down to one (8,128)
            # vreg-shaped partial with pure VPU adds; the cross-lane reduce
            # happens once, outside the kernel.
            part = e[0:8, :]
            for k in range(1, sub_rows // 8):
                part = part + e[k * 8:(k + 1) * 8, :]
            return acc + part

        acc0 = jnp.zeros((8, LANES), jnp.float32)
        if num_chunks == 1:
            acc = chunk_sum(0, acc0)
        else:
            acc = lax.fori_loop(
                0, num_chunks,
                lambda c, a: chunk_sum(pl.multiple_of(c * sub_rows, sub_rows), a),
                acc0)
        out_ref[...] = acc

    return kernel


@jax.jit
def binary_consistency_loss(mask1, mask2):
    assert mask1.shape == mask2.shape
    n = mask1.size                    # static, true element count (mean divisor)

    m1 = mask1.reshape(-1)
    m2 = mask2.reshape(-1)

    rem = n % LANES
    if rem:
        # Only lane-alignment padding (< 128 elements).  BCE(p=1.0, target=1)
        # == 0 under the -100 clamp, so padded elements contribute exactly 0.
        # TODO(synk): for huge non-lane-aligned inputs this is still one extra
        # HBM pass; producers should hand over lane-aligned buffers.
        pad = LANES - rem
        m1 = jnp.pad(m1, (0, pad), constant_values=1.0)
        m2 = jnp.pad(m2, (0, pad), constant_values=1.0)

    rows = m1.size // LANES           # = ceil(n / 128)
    m1 = m1.reshape(rows, LANES)      # metadata-only reshape, no HBM pass
    m2 = m2.reshape(rows, LANES)

    num_tiles, block_rows, sub_rows = _choose_tiling(rows)
    kernel = _make_kernel(block_rows, sub_rows, num_tiles, rows)

    partials = pl.pallas_call(
        kernel,
        out_shape=jax.ShapeDtypeStruct((num_tiles * 8, LANES), jnp.float32),
        grid_spec=pltpu.PrefetchScalarGridSpec(
            num_scalar_prefetch=0,
            grid=(num_tiles,),
            in_specs=[
                pl.BlockSpec((block_rows, LANES), lambda i: (i, 0)),
                pl.BlockSpec((block_rows, LANES), lambda i: (i, 0)),
            ],
            out_specs=pl.BlockSpec((8, LANES), lambda i: (i, 0)),
        ),
        compiler_params=pltpu.CompilerParams(
            dimension_semantics=("parallel",),
            vmem_limit_bytes=32 * 1024 * 1024,
        ),
    )(m1, m2)

    # Tiny final cross-lane reduction; 1/n is a static Python float
    # (reduction='mean' on both BCE terms -> (sum1 + sum2) / n).
    return jnp.sum(partials) * (1.0 / n)


def _reference(mask1, mask2):
    # Pure-JAX mirror of the PyTorch module (two-log clamped BCE).
    m1 = mask1.astype(jnp.float32)
    m2 = mask2.astype(jnp.float32)
    t1 = (m1 > 0.5).astype(jnp.float32)
    t2 = (m2 > 0.5).astype(jnp.float32)

    def bce(p, t):
        logp = jnp.maximum(jnp.log(p), -100.0)
        log1mp = jnp.maximum(jnp.log(1.0 - p), -100.0)
        return jnp.mean(-(t * logp + (1.0 - t) * log1mp))

    return bce(m1, t2) + bce(m2, t1)


if __name__ == "__main__":
    key = jax.random.PRNGKey(0)
    k1, k2 = jax.random.split(key)
    # NCHW masks with values strictly inside (0, 1), like sigmoid outputs.
    mask1 = jax.random.uniform(k1, (2, 4, 16, 16), dtype=jnp.float32,
                               minval=0.01, maxval=0.99)
    mask2 = jax.random.uniform(k2, (2, 4, 16, 16), dtype=jnp.float32,
                               minval=0.01, maxval=0.99)

    loss = binary_consistency_loss(mask1, mask2)
    jax.block_until_ready(loss)

    ref = _reference(mask1, mask2)
    assert jnp.allclose(loss, ref, rtol=1e-5, atol=1e-5), (loss, ref)

    print("KERNEL_OK")
</pallas_src>

<mosaic_0001>
module attributes {stable_mosaic.version = 11 : i64} {
  func.func @kernel(%arg0: i32, %arg1: memref<16x128xf32, #tpu.memory_space<vmem>>, %arg2: memref<16x128xf32, #tpu.memory_space<vmem>>, %arg3: memref<8x128xf32, #tpu.memory_space<vmem>>) attributes {dimension_semantics = [#tpu.dimension_semantics<parallel>], iteration_bounds = array<i64: 1>, scalar_prefetch = 0 : i64, scratch_operands = 0 : i64, tpu.core_type = #tpu.core_type<tc>, window_params = [{transform_indices = @transform_0, window_bounds = array<i64: 16, 128>}, {transform_indices = @transform_1, window_bounds = array<i64: 16, 128>}, {transform_indices = @transform_2, window_bounds = array<i64: 8, 128>}]} {
    %cst = arith.constant 0.000000e+00 : f32
    %0 = vector.broadcast %cst : f32 to vector<8x128xf32>
    %c0 = arith.constant 0 : index
    %c0_0 = arith.constant 0 : index
    %1 = vector.load %arg1[%c0, %c0_0] : memref<16x128xf32, #tpu.memory_space<vmem>>, vector<16x128xf32>
    %c0_1 = arith.constant 0 : index
    %c0_2 = arith.constant 0 : index
    %2 = vector.load %arg2[%c0_1, %c0_2] : memref<16x128xf32, #tpu.memory_space<vmem>>, vector<16x128xf32>
    %cst_3 = arith.constant 5.000000e-01 : f32
    %3 = vector.broadcast %cst_3 : f32 to vector<16x128xf32>
    %4 = arith.cmpf ogt, %2, %3 : vector<16x128xf32>
    %cst_4 = arith.constant 1.000000e+00 : f32
    %5 = vector.broadcast %cst_4 : f32 to vector<16x128xf32>
    %6 = arith.subf %5, %1 : vector<16x128xf32>
    %7 = arith.select %4, %1, %6 : vector<16x128xi1>, vector<16x128xf32>
    %cst_5 = arith.constant 5.000000e-01 : f32
    %8 = vector.broadcast %cst_5 : f32 to vector<16x128xf32>
    %9 = arith.cmpf ogt, %1, %8 : vector<16x128xf32>
    %cst_6 = arith.constant 1.000000e+00 : f32
    %10 = vector.broadcast %cst_6 : f32 to vector<16x128xf32>
    %11 = arith.subf %10, %2 : vector<16x128xf32>
    %12 = arith.select %9, %2, %11 : vector<16x128xi1>, vector<16x128xf32>
    %13 = math.log %7 : vector<16x128xf32>
    %cst_7 = arith.constant -1.000000e+02 : f32
    %14 = vector.broadcast %cst_7 : f32 to vector<16x128xf32>
    %15 = arith.maximumf %13, %14 : vector<16x128xf32>
    %16 = math.log %12 : vector<16x128xf32>
    %cst_8 = arith.constant -1.000000e+02 : f32
    %17 = vector.broadcast %cst_8 : f32 to vector<16x128xf32>
    %18 = arith.maximumf %16, %17 : vector<16x128xf32>
    %19 = arith.addf %15, %18 : vector<16x128xf32>
    %cst_9 = arith.constant 0.000000e+00 : f32
    %20 = vector.broadcast %cst_9 : f32 to vector<16x128xf32>
    %21 = arith.subf %20, %19 : vector<16x128xf32>
    %22 = vector.extract_strided_slice %21 {offsets = [0, 0], sizes = [8, 128], strides = [1, 1]} : vector<16x128xf32> to vector<8x128xf32>
    %23 = vector.extract_strided_slice %21 {offsets = [8, 0], sizes = [8, 128], strides = [1, 1]} : vector<16x128xf32> to vector<8x128xf32>
    %24 = arith.addf %22, %23 : vector<8x128xf32>
    %25 = arith.addf %0, %24 : vector<8x128xf32>
    %c0_10 = arith.constant 0 : index
    %c0_11 = arith.constant 0 : index
    %26 = vector.load %arg3[%c0_10, %c0_11] : memref<8x128xf32, #tpu.memory_space<vmem>>, vector<8x128xf32>
    tpu.vector_store %arg3[%c0_10, %c0_11], %25 {strides = array<i32>} : memref<8x128xf32, #tpu.memory_space<vmem>>, vector<8x128xf32>,
    return
  }
  func.func @transform_0(%arg0: i32) -> (i32, i32) {
    %c0_i32 = arith.constant 0 : i32
    %c0_i32_0 = arith.constant 0 : i32
    return %arg0, %c0_i32 : i32, i32
  }
  func.func @transform_1(%arg0: i32) -> (i32, i32) {
    %c0_i32 = arith.constant 0 : i32
    %c0_i32_0 = arith.constant 0 : i32
    return %arg0, %c0_i32 : i32, i32
  }
  func.func @transform_2(%arg0: i32) -> (i32, i32) {
    %c0_i32 = arith.constant 0 : i32
    %c0_i32_0 = arith.constant 0 : i32
    return %arg0, %c0_i32 : i32, i32
  }
}

</mosaic_0001>

<llo_original>
// kernel: binary_consistency_loss.1
$region0: #{binary_consistency_loss.1}
  #allocation0 [shape = 'u32[]', space=smem, size = 0x4, offset = 0x4, fixed_abs, tag = 'smem constant byte address 0x4 - core index']
  #allocation1 [shape = 'u32[144,128]{1,0:T(1,128)}', space=vmem, size = 0x12000, scoped, tag = 'internal scratch']
  %s0 = inlined_call_operand.vmem [shape: f32[16,128], index: 0, kind: input, shape index: {}]
  %s1 = inlined_call_operand.vmem [shape: f32[16,128], index: 1, kind: input, shape index: {}]
  %s2 = inlined_call_operand.vmem [shape: f32[8,128], index: 2, kind: output, shape index: {}]
  %s3 = sld [smem:[#allocation0]]
  $region18: #{binary_consistency_loss.1} parent=0
    _
  %s5 = ssub.s32 1, %s3
  %s6 = scalar_select 0, %s5, %s3
  // Predicated region
  $region2: #{binary_consistency_loss.1} parent=0 // pred_check
    _
  $region3: #{binary_consistency_loss.1} parent=0 // pred_check_branch
    %8 = sbr.rel (0) target = $region5
  $region4: #{binary_consistency_loss.1} parent=0 // pred_region
    _
  $region5: #{binary_consistency_loss.1} parent=0 // pred_fallthru
    _
  // Predicated region
  $region6: #{binary_consistency_loss.1} parent=0 // pred_check
    _
  $region7: #{binary_consistency_loss.1} parent=0 // pred_check_branch
    %10 = sbr.rel (0) target = $region9
  $region8: #{binary_consistency_loss.1} parent=0 // pred_region
    _
  $region9: #{binary_consistency_loss.1} parent=0 // pred_fallthru
    _
  %v11 = vld [vmem:[%s0] sm:$0xff]
  %v12 = vld [vmem:[%s0 + $0x8] sm:$0xff]
  %v13 = vld [vmem:[%s1] sm:$0xff]
  %v14 = vld [vmem:[%s1 + $0x8] sm:$0xff]
  %vm15 = vcmp.gt.f32.partialorder %v13, 0.5
  %vm16 = vcmp.gt.f32.partialorder %v14, 0.5
  %v17 = vsub.f32 1.0, %v11
  %v18 = vsub.f32 1.0, %v12
  %v19 = vsel %vm15, %v11, %v17
  %v20 = vsel %vm16, %v12, %v18
  %vm21 = vcmp.gt.f32.partialorder %v11, 0.5
  %vm22 = vcmp.gt.f32.partialorder %v12, 0.5
  %v23 = vsub.f32 1.0, %v13
  %v24 = vsub.f32 1.0, %v14
  %v25 = vsel %vm21, %v13, %v23
  %v26 = vsel %vm22, %v14, %v24
  %v27 = vlog2.pop %v19
  %v28 = vmul.f32 %v27, 0.6931472
  %v29 = vlog2.pop %v20
  %v30 = vmul.f32 %v29, 0.6931472
  %v31 = vmax.f32 %v28, -100.0
  %v32 = vmax.f32 %v30, -100.0
  %v33 = vlog2.pop %v25
  %v34 = vmul.f32 %v33, 0.6931472
  %v35 = vlog2.pop %v26
  %v36 = vmul.f32 %v35, 0.6931472
  %v37 = vmax.f32 %v34, -100.0
  %v38 = vmax.f32 %v36, -100.0
  %v39 = vadd.f32 %v31, %v37
  %v40 = vadd.f32 %v32, %v38
  %v41 = vsub.f32 0.0, %v39
  %v42 = vsub.f32 0.0, %v40
  %v43 = vadd.f32 %v41, %v42
  %v44 = vadd.f32 %v43, 0.0
  %45 = vst [vmem:[%s2] sm:$0xff] %v44
  // Predicated region
  $region10: #{binary_consistency_loss.1} parent=0 // pred_check
    _
  $region11: #{binary_consistency_loss.1} parent=0 // pred_check_branch
    %47 = sbr.rel (0) target = $region13
  $region12: #{binary_consistency_loss.1} parent=0 // pred_region
    _
  $region13: #{binary_consistency_loss.1} parent=0 // pred_fallthru
    _
  // Predicated region
  $region14: #{binary_consistency_loss.1} parent=0 // pred_check
    _
  $region15: #{binary_consistency_loss.1} parent=0 // pred_check_branch
    %49 = sbr.rel (0) target = $region17
  $region16: #{binary_consistency_loss.1} parent=0 // pred_region
    _
  $region17: #{binary_consistency_loss.1} parent=0 // pred_fallthru
    _

</llo_original>
